<compile_context>
chip_gen: v5e
topology: v5e:2x2
jax: 0.10.0
libtpu: 0.0.40
codegen_flags: <defaults>
</compile_context>

<pallas_src>
import jax
import jax.numpy as jnp
import numpy as np
from jax import lax
from jax.experimental import pallas as pl
from jax.experimental.pallas import tpu as pltpu

# ------------------------- toy config (deterministic) -------------------------
EMBED = 32          # config.embedding_size
VOCAB = 256         # config.vocab_size (multiple of 128 -> lane-dense output)


def _round_up(x: int, m: int) -> int:
    return ((x + m - 1) // m) * m


# ------------------------- kernel -------------------------
def lm_head_kernel(x_ref, w_ref, o_ref):
    # x_ref: [bm, E]    w_ref: [bv, E]  (PyTorch nn.Linear layout, no transpose)
    # o_ref: [bm, bv] = x @ w.T, accumulated in f32 on the MXU.
    o_ref[...] = lax.dot_general(
        x_ref[...],
        w_ref[...],
        dimension_numbers=(((1,), (1,)), ((), ())),
        preferred_element_type=jnp.float32,
    ).astype(o_ref.dtype)


# ------------------------- wrapper -------------------------
def roformer_v2_lm_head_pallas(
    hidden_states,          # [B, S, E]
    decoder_weight,         # [V, E]  (PyTorch nn.Linear weight layout)
    *,
    block_m=256,            # row tile (multiple of 8; 128+ keeps the MXU busy)
    block_v=2048,           # vocab tile (multiple of 128; lane-dense stores)
    compute_dtype=None,     # e.g. jnp.bfloat16 for the native MXU path
    vmem_limit_bytes=None,
):
    B, S, E = hidden_states.shape
    V, E_w = decoder_weight.shape
    assert E == E_w, "decoder weight embedding dim mismatch"
    out_dtype = hidden_states.dtype

    x = hidden_states.reshape(B * S, E)
    w = decoder_weight                      # keep [V, E]; no per-call transpose
    if compute_dtype is not None:
        x = x.astype(compute_dtype)
        w = w.astype(compute_dtype)

    N = B * S

    # Row tile: as big as requested but never bigger than the (8-aligned) row count.
    bm = min(block_m, _round_up(N, 8))
    N_pad = _round_up(N, bm)
    # Vocab tile: lane-dense (multiple of 128), never bigger than the padded vocab.
    bv = min(block_v, _round_up(V, 128))
    V_pad = _round_up(V, bv)

    if N_pad != N:
        x = jnp.pad(x, ((0, N_pad - N), (0, 0)))
    if V_pad != V:
        w = jnp.pad(w, ((0, V_pad - V), (0, 0)))

    # Vocab axis OUTER, row axis INNER: the [bv, E] weight tile's block index is
    # constant across the inner axis, so it is held resident in VMEM and the
    # full weight matrix is streamed from HBM exactly once.
    grid = (V_pad // bv, N_pad // bm)

    in_itemsize = jnp.dtype(x.dtype).itemsize
    out_itemsize = jnp.dtype(out_dtype).itemsize
    # Double-buffered inputs + output tile working set (used to set an explicit
    # VMEM budget that is safe on v7x's 64 MiB and generous on v5e/v6e).
    working_set = 2 * (bm * E * in_itemsize + bv * E * in_itemsize + bm * bv * out_itemsize)
    if vmem_limit_bytes is None:
        vmem_limit_bytes = int(min(max(working_set + (8 << 20), 32 << 20), 64 << 20))

    cost = pl.CostEstimate(
        flops=int(2 * N_pad * E * V_pad),
        transcendentals=0,
        bytes_accessed=int(
            N_pad * E * in_itemsize + V_pad * E * in_itemsize + N_pad * V_pad * out_itemsize
        ),
    )

    out = pl.pallas_call(
        lm_head_kernel,
        out_shape=jax.ShapeDtypeStruct((N_pad, V_pad), out_dtype),
        grid=grid,
        in_specs=[
            pl.BlockSpec((bm, E), lambda j, i: (i, 0)),   # activations stream on inner axis
            pl.BlockSpec((bv, E), lambda j, i: (j, 0)),   # weight tile resident across inner axis
        ],
        out_specs=pl.BlockSpec((bm, bv), lambda j, i: (i, j)),
        compiler_params=pltpu.CompilerParams(
            dimension_semantics=("parallel", "parallel"),
            vmem_limit_bytes=vmem_limit_bytes,
        ),
        cost_estimate=cost,
    )(x, w)

    return out[:N, :V].reshape(B, S, V)


# ------------------------- pure-JAX reference -------------------------
def roformer_v2_lm_head_ref(hidden_states, decoder_weight):
    # nn.Linear(bias=False): y = x @ W.T
    return jnp.einsum(
        "bse,ve->bsv", hidden_states, decoder_weight,
        preferred_element_type=jnp.float32,
    ).astype(hidden_states.dtype)


# ------------------------- main -------------------------
if __name__ == "__main__":
    B, S = 2, 8

    key = jax.random.PRNGKey(0)
    k_h, k_w, k_h2, k_w2 = jax.random.split(key, 4)

    hidden = jax.random.normal(k_h, (B, S, EMBED), jnp.float32)
    decoder_weight = jax.random.normal(k_w, (VOCAB, EMBED), jnp.float32) * 0.02

    # 1) fp32 path (matches the PyTorch module bit-for-bit semantics).
    out = roformer_v2_lm_head_pallas(hidden, decoder_weight)
    out = jax.block_until_ready(out)
    ref = roformer_v2_lm_head_ref(hidden, decoder_weight)
    np.testing.assert_allclose(np.asarray(out), np.asarray(ref), rtol=1e-4, atol=1e-4)

    # 2) bf16-operand path (perf configuration: bf16 operands, f32 accumulate).
    out_bf16 = roformer_v2_lm_head_pallas(hidden, decoder_weight, compute_dtype=jnp.bfloat16)
    out_bf16 = jax.block_until_ready(out_bf16)
    np.testing.assert_allclose(np.asarray(out_bf16), np.asarray(ref), rtol=2e-2, atol=2e-2)

    # 3) ragged shapes: vocab not a multiple of 128, rows not a multiple of 8
    #    (exercises the wrapper's pad + slice-back path).
    V_odd, N_odd = 200, 13
    hidden2 = jax.random.normal(k_h2, (1, N_odd, EMBED), jnp.float32)
    weight2 = jax.random.normal(k_w2, (V_odd, EMBED), jnp.float32) * 0.02
    out2 = roformer_v2_lm_head_pallas(hidden2, weight2)
    out2 = jax.block_until_ready(out2)
    ref2 = roformer_v2_lm_head_ref(hidden2, weight2)
    np.testing.assert_allclose(np.asarray(out2), np.asarray(ref2), rtol=1e-4, atol=1e-4)

    print("KERNEL_OK")
</pallas_src>

<mosaic_0001>
module attributes {stable_mosaic.version = 11 : i64} {
  func.func @lm_head_kernel(%arg0: i32, %arg1: i32, %arg2: memref<16x32xf32, #tpu.memory_space<vmem>>, %arg3: memref<256x32xf32, #tpu.memory_space<vmem>>, %arg4: memref<16x256xf32, #tpu.memory_space<vmem>>) attributes {dimension_semantics = [#tpu.dimension_semantics<parallel>, #tpu.dimension_semantics<parallel>], iteration_bounds = array<i64: 1, 1>, scalar_prefetch = 0 : i64, scratch_operands = 0 : i64, tpu.core_type = #tpu.core_type<tc>, window_params = [{transform_indices = @transform_0, window_bounds = array<i64: 16, 32>}, {transform_indices = @transform_1, window_bounds = array<i64: 256, 32>}, {transform_indices = @transform_2, window_bounds = array<i64: 16, 256>}]} {
    %c0 = arith.constant 0 : index
    %c0_0 = arith.constant 0 : index
    %0 = vector.load %arg2[%c0, %c0_0] : memref<16x32xf32, #tpu.memory_space<vmem>>, vector<16x32xf32>
    %c0_1 = arith.constant 0 : index
    %c0_2 = arith.constant 0 : index
    %1 = vector.load %arg3[%c0_1, %c0_2] : memref<256x32xf32, #tpu.memory_space<vmem>>, vector<256x32xf32>
    %cst = arith.constant dense<0.000000e+00> : vector<16x256xf32>
    %2 = tpu.matmul %0, %1, %cst {dimension_numbers = #tpu.dot_dimension_numbers<[1], [1], [0], [0], [0, 0, 1, 0], [], []>} : vector<16x32xf32>, vector<256x32xf32>, vector<16x256xf32> -> vector<16x256xf32>
    %c0_3 = arith.constant 0 : index
    %c0_4 = arith.constant 0 : index
    %3 = vector.load %arg4[%c0_3, %c0_4] : memref<16x256xf32, #tpu.memory_space<vmem>>, vector<16x256xf32>
    tpu.vector_store %arg4[%c0_3, %c0_4], %2 {strides = array<i32>} : memref<16x256xf32, #tpu.memory_space<vmem>>, vector<16x256xf32>,
    return
  }
  func.func @transform_0(%arg0: i32, %arg1: i32) -> (i32, i32) {
    %c0_i32 = arith.constant 0 : i32
    %c0_i32_0 = arith.constant 0 : i32
    return %arg1, %c0_i32 : i32, i32
  }
  func.func @transform_1(%arg0: i32, %arg1: i32) -> (i32, i32) {
    %c0_i32 = arith.constant 0 : i32
    %c0_i32_0 = arith.constant 0 : i32
    return %arg0, %c0_i32 : i32, i32
  }
  func.func @transform_2(%arg0: i32, %arg1: i32) -> (i32, i32) {
    %c0_i32 = arith.constant 0 : i32
    return %arg1, %arg0 : i32, i32
  }
}

</mosaic_0001>

<llo_original>
// kernel: tpu_custom_call.1
$region0: #{tpu_custom_call.1}
  #allocation0 [shape = 'u32[]', space=smem, size = 0x4, offset = 0x4, fixed_abs, tag = 'smem constant byte address 0x4 - core index']
  #allocation1 [shape = 'u32[72,128]{1,0:T(1,128)}', space=vmem, size = 0x9000, scoped, tag = 'internal scratch']
  %s0 = inlined_call_operand.vmem [shape: f32[16,32], index: 0, kind: input, shape index: {}]
  %s1 = inlined_call_operand.vmem [shape: f32[256,32], index: 1, kind: input, shape index: {}]
  %s2 = inlined_call_operand.hbm [shape: f32[16,256], index: 2, kind: output, shape index: {}]
  %s3 = sld [smem:[#allocation0]]
  $region18: #{tpu_custom_call.1} parent=0
    _
  %s5 = ssub.s32 1, %s3
  %s6 = scalar_select 0, %s5, %s3
  $region1: #{tpu_custom_call.1} parent=0
    #allocation2 [shape = 'u8[16384]{0}', space=vmem, size = 0x4000, scoped, tag = 'output window, operand 0, single buffered']
    #allocation3 [shape = 's32[1]{0}', space=sflag, size = 0x4, scoped, tag = 'scoped memory for tpu_custom_call.1']
    %7 = vsyncpa [#allocation3], 0
    // Predicated region
    $region2: #{tpu_custom_call.1} parent=1 // pred_check
      _
    $region3: #{tpu_custom_call.1} parent=1 // pred_check_branch
      %9 = sbr.rel (0) target = $region5
    $region4: #{tpu_custom_call.1} parent=1 // pred_region
      _
    $region5: #{tpu_custom_call.1} parent=1 // pred_fallthru
      _
    // Predicated region
    $region6: #{tpu_custom_call.1} parent=1 // pred_check
      _
    $region7: #{tpu_custom_call.1} parent=1 // pred_check_branch
      %11 = sbr.rel (0) target = $region9
    $region8: #{tpu_custom_call.1} parent=1 // pred_region
      _
    $region9: #{tpu_custom_call.1} parent=1 // pred_fallthru
      _
    %v12 = vld [vmem:[%s0] sm:$0xff]
    %v13 = vld [vmem:[%s0 + $0x8] sm:$0xff]
    %v14 = vld [vmem:[%s1] sm:$0xff]
    %v15 = vld [vmem:[%s1 + $0x8] sm:$0xff]
    %v16 = vld [vmem:[%s1 + $0x10] sm:$0xff]
    %v17 = vld [vmem:[%s1 + $0x18] sm:$0xff]
    %v18 = vld [vmem:[%s1 + $0x20] sm:$0xff]
    %v19 = vld [vmem:[%s1 + $0x28] sm:$0xff]
    %v20 = vld [vmem:[%s1 + $0x30] sm:$0xff]
    %v21 = vld [vmem:[%s1 + $0x38] sm:$0xff]
    %v22 = vld [vmem:[%s1 + $0x40] sm:$0xff]
    %v23 = vld [vmem:[%s1 + $0x48] sm:$0xff]
    %v24 = vld [vmem:[%s1 + $0x50] sm:$0xff]
    %v25 = vld [vmem:[%s1 + $0x58] sm:$0xff]
    %v26 = vld [vmem:[%s1 + $0x60] sm:$0xff]
    %v27 = vld [vmem:[%s1 + $0x68] sm:$0xff]
    %v28 = vld [vmem:[%s1 + $0x70] sm:$0xff]
    %v29 = vld [vmem:[%s1 + $0x78] sm:$0xff]
    %v30 = vld [vmem:[%s1 + $0x80] sm:$0xff]
    %v31 = vld [vmem:[%s1 + $0x88] sm:$0xff]
    %v32 = vld [vmem:[%s1 + $0x90] sm:$0xff]
    %v33 = vld [vmem:[%s1 + $0x98] sm:$0xff]
    %v34 = vld [vmem:[%s1 + $0xa0] sm:$0xff]
    %v35 = vld [vmem:[%s1 + $0xa8] sm:$0xff]
    %v36 = vld [vmem:[%s1 + $0xb0] sm:$0xff]
    %v37 = vld [vmem:[%s1 + $0xb8] sm:$0xff]
    %v38 = vld [vmem:[%s1 + $0xc0] sm:$0xff]
    %v39 = vld [vmem:[%s1 + $0xc8] sm:$0xff]
    %v40 = vld [vmem:[%s1 + $0xd0] sm:$0xff]
    %v41 = vld [vmem:[%s1 + $0xd8] sm:$0xff]
    %v42 = vld [vmem:[%s1 + $0xe0] sm:$0xff]
    %v43 = vld [vmem:[%s1 + $0xe8] sm:$0xff]
    %v44 = vld [vmem:[%s1 + $0xf0] sm:$0xff]
    %v45 = vld [vmem:[%s1 + $0xf8] sm:$0xff]
    %vm46 = vcmask 261120
    %v48 = vsel %vm46, %v12, 0
    %v51 = vsel %vm46, %v13, 0
    %v54 = vsel %vm46, %v14, 0
    %v57 = vsel %vm46, %v15, 0
    %v60 = vsel %vm46, %v16, 0
    %v63 = vsel %vm46, %v17, 0
    %v66 = vsel %vm46, %v18, 0
    %v69 = vsel %vm46, %v19, 0
    %v72 = vsel %vm46, %v20, 0
    %v75 = vsel %vm46, %v21, 0
    %v78 = vsel %vm46, %v22, 0
    %v81 = vsel %vm46, %v23, 0
    %v84 = vsel %vm46, %v24, 0
    %v87 = vsel %vm46, %v25, 0
    %v90 = vsel %vm46, %v26, 0
    %v93 = vsel %vm46, %v27, 0
    %v96 = vsel %vm46, %v28, 0
    %v99 = vsel %vm46, %v29, 0
    %v102 = vsel %vm46, %v30, 0
    %v105 = vsel %vm46, %v31, 0
    %v108 = vsel %vm46, %v32, 0
    %v111 = vsel %vm46, %v33, 0
    %v114 = vsel %vm46, %v34, 0
    %v117 = vsel %vm46, %v35, 0
    %v120 = vsel %vm46, %v36, 0
    %v123 = vsel %vm46, %v37, 0
    %v126 = vsel %vm46, %v38, 0
    %v129 = vsel %vm46, %v39, 0
    %v132 = vsel %vm46, %v40, 0
    %v135 = vsel %vm46, %v41, 0
    %v138 = vsel %vm46, %v42, 0
    %v141 = vsel %vm46, %v43, 0
    %v144 = vsel %vm46, %v44, 0
    %v147 = vsel %vm46, %v45, 0
    %149 = vmatpush.xpose.msra.mxu0 %v99
    %150 = vmatpush.xpose.msra.mxu0 %v96
    %151 = vmatpush.xpose.msra.mxu0 %v93
    %152 = vmatpush.xpose.msra.mxu0 %v90
    %153 = vmatpush.xpose.msra.mxu0 %v87
    %154 = vmatpush.xpose.msra.mxu0 %v84
    %155 = vmatpush.xpose.msra.mxu0 %v81
    %156 = vmatpush.xpose.msra.mxu0 %v78
    %157 = vmatpush.xpose.msra.mxu0 %v75
    %158 = vmatpush.xpose.msra.mxu0 %v72
    %159 = vmatpush.xpose.msra.mxu0 %v69
    %160 = vmatpush.xpose.msra.mxu0 %v66
    %161 = vmatpush.xpose.msra.mxu0 %v63
    %162 = vmatpush.xpose.msra.mxu0 %v60
    %163 = vmatpush.xpose.msra.mxu0 %v57
    %164 = vmatpush.xpose.msra.mxu0 %v54
    %165 = vmatmul.f32.gmra.mxu0 %v48
    %v166 = vpop.f32.mrf.mxu0
    %v167 = vadd.f32 0.0, %v166
    %168 = vmatmul.f32.gmra.mxu0 %v51
    %v169 = vpop.f32.mrf.mxu0
    %v170 = vadd.f32 0.0, %v169
    %171 = vdwg.mxu0
    %172 = vmatpush.xpose.msra.mxu0 %v147
    %173 = vmatpush.xpose.msra.mxu0 %v144
    %174 = vmatpush.xpose.msra.mxu0 %v141
    %175 = vmatpush.xpose.msra.mxu0 %v138
    %176 = vmatpush.xpose.msra.mxu0 %v135
    %177 = vmatpush.xpose.msra.mxu0 %v132
    %178 = vmatpush.xpose.msra.mxu0 %v129
    %179 = vmatpush.xpose.msra.mxu0 %v126
    %180 = vmatpush.xpose.msra.mxu0 %v123
    %181 = vmatpush.xpose.msra.mxu0 %v120
    %182 = vmatpush.xpose.msra.mxu0 %v117
    %183 = vmatpush.xpose.msra.mxu0 %v114
    %184 = vmatpush.xpose.msra.mxu0 %v111
    %185 = vmatpush.xpose.msra.mxu0 %v108
    %186 = vmatpush.xpose.msra.mxu0 %v105
    %187 = vmatpush.xpose.msra.mxu0 %v102
    %188 = vmatmul.f32.gmra.mxu0 %v48
    %v189 = vpop.f32.mrf.mxu0
    %v190 = vadd.f32 0.0, %v189
    %191 = vmatmul.f32.gmra.mxu0 %v51
    %v192 = vpop.f32.mrf.mxu0
    %v193 = vadd.f32 0.0, %v192
    %194 = vdwg.mxu0
    %195 = vst [vmem:[#allocation2] sm:$0xff] %v167
    %196 = vst [vmem:[#allocation2 + $0x8] sm:$0xff] %v190
    %197 = vst [vmem:[#allocation2 + $0x10] sm:$0xff] %v170
    %198 = vst [vmem:[#allocation2 + $0x18] sm:$0xff] %v193
    // Predicated region
    $region10: #{tpu_custom_call.1} parent=1 // pred_check
      _
    $region11: #{tpu_custom_call.1} parent=1 // pred_check_branch
      %200 = sbr.rel (0) target = $region13
    $region12: #{tpu_custom_call.1} parent=1 // pred_region
      %202 = vsyncadd [#allocation3], 0
      %s203 = sshll.u32 [#allocation2], 4
      %s204 = int_to_ptr.vmem [resolvable:$true] %s203
      %s205 = sshll.u32 %s2, 4
      %s206 = int_to_ptr.hbm [resolvable:$true] %s205
      %211 = dma.vmem_to_hbm [thread:$0]  %s204, 512, %s206, [#allocation3], 256, 256, 16
    $region13: #{tpu_custom_call.1} parent=1 // pred_fallthru
      _
    // Predicated region
    $region14: #{tpu_custom_call.1} parent=1 // pred_check
      _
    $region15: #{tpu_custom_call.1} parent=1 // pred_check_branch
      %213 = sbr.rel (0) target = $region17
    $region16: #{tpu_custom_call.1} parent=1 // pred_region
      %215 = dma.done [#allocation3], 512
    $region17: #{tpu_custom_call.1} parent=1 // pred_fallthru
      _
    %216 = vsyncpa [#allocation3], 1

</llo_original>
